<compile_context>
chip_gen: v7x
topology: tpu7x:2x2x1
jax: 0.10.0
libtpu: 0.0.40
codegen_flags: <defaults>
</compile_context>

<pallas_src>
import jax
import jax.numpy as jnp
from jax.experimental import pallas as pl
from jax.experimental.pallas import tpu as pltpu

IN_F, HID_F, MID_F, OUT_F = 71, 71, 10, 1


def _round_up(x, m):
    return ((x + m - 1) // m) * m


def mlp_kernel(xt_ref, w1_ref, b1_ref, w2_ref, b2_ref, w3_ref, b3_ref, o_ref):
    # Layer 1: fc1 + ReLU.  (71,71) @ (71,T) -> (71,T); bf16 MXU, f32 acc.
    h1 = jnp.dot(w1_ref[...], xt_ref[...].astype(w1_ref.dtype),
                 preferred_element_type=jnp.float32)
    h1 = jnp.maximum(h1 + b1_ref[...], 0.0)            # (71, T) lane-dense

    # Layer 2: fc2 + ReLU.  (10,71) @ (71,T) -> (10,T).
    h2 = jnp.dot(w2_ref[...], h1.astype(w2_ref.dtype),
                 preferred_element_type=jnp.float32)
    h2 = jnp.maximum(h2 + b2_ref[...], 0.0)            # (10, T) f32

    # Layer 3: fc3 (10 -> 1) + tanh, in f32.  Done as an elementwise multiply
    # plus a sublane reduction (VPU/XLU) -- avoids an MXU pass whose stationary
    # operand would be the (10, T) activation, and keeps the output (1, T)
    # fully lane-dense for the tanh (EUP) and the store.
    h3 = jnp.sum(h2 * w3_ref[...], axis=0, keepdims=True) + b3_ref[...]
    o_ref[...] = jnp.tanh(h3).astype(o_ref.dtype)      # (1, T)


def chess_eval_net1(x, params, *, tile_b=8192, compute_dtype=jnp.bfloat16,
                    feature_major=False):
    """Fused forward pass of ChessEvaulationNet1.

    x: [B, 71] float32 (or [71, B] if feature_major=True)
    params: torch-oriented: w1 [71,71], b1 [71], w2 [10,71], b2 [10],
            w3 [1,10], b3 [1]   (y = x @ W.T + b per layer)
    returns: [B, 1] float32
    """
    if feature_major:
        # Caller already supplies feature-major x (71, B): no wrapper pass at
        # all; the bf16 cast happens in-kernel (in VMEM).
        B = x.shape[1]
        xt = x
        pad = (-B) % 128
        if pad:
            xt = jnp.pad(xt, ((0, 0), (0, pad)))
    else:
        B = x.shape[0]
        pad = (-B) % 128
        # Single fused pass over x: pad (<=127 rows) + transpose + bf16 cast.
        xt = jnp.pad(x, ((0, pad), (0, 0))).T.astype(compute_dtype)
    B_pad = xt.shape[1]

    # Tile the batch (lane) axis: multiple of 128, capped so we get >= 2 grid
    # steps whenever B allows (v7x megacore needs >= 2 "parallel" steps).
    two_step_cap = max(128, _round_up((B_pad + 1) // 2, 128))
    tile_b = max(128, min(_round_up(tile_b, 128), two_step_cap))
    n_tiles = pl.cdiv(B_pad, tile_b)   # ragged last block is fine (masked)

    # MXU operands in bf16 (f32 accumulation); layer-3 weights + all biases f32.
    w1 = params["w1"].astype(compute_dtype)                      # (71, 71)
    w2 = params["w2"].astype(compute_dtype)                      # (10, 71)
    b1 = params["b1"].astype(jnp.float32).reshape(HID_F, 1)      # (71, 1)
    b2 = params["b2"].astype(jnp.float32).reshape(MID_F, 1)      # (10, 1)
    w3 = params["w3"].astype(jnp.float32).reshape(MID_F, 1)      # (10, 1)
    b3 = params["b3"].astype(jnp.float32).reshape(1, 1)          # (1, 1)

    # Weights/biases: full-array blocks with constant index_map -> stay
    # resident in VMEM across all batch tiles (no re-DMA per step).
    resident = lambda a: pl.BlockSpec(a.shape, lambda i: (0,) * a.ndim)

    flops = 2 * B_pad * (IN_F * HID_F + HID_F * MID_F + MID_F * OUT_F)
    bytes_accessed = (xt.size * xt.dtype.itemsize          # streamed input
                      + B_pad * 4                          # f32 output
                      + w1.size * 2 + w2.size * 2
                      + (b1.size + b2.size + w3.size + b3.size) * 4)
    cost = pl.CostEstimate(flops=flops, transcendentals=B_pad,
                           bytes_accessed=bytes_accessed)

    out = pl.pallas_call(
        mlp_kernel,
        out_shape=jax.ShapeDtypeStruct((1, B_pad), jnp.float32),
        grid=(n_tiles,),
        in_specs=[
            pl.BlockSpec((IN_F, tile_b), lambda i: (0, i)),   # x^T, streamed
            resident(w1), resident(b1),
            resident(w2), resident(b2),
            resident(w3), resident(b3),
        ],
        out_specs=pl.BlockSpec((1, tile_b), lambda i: (0, i)),  # lane-dense
        compiler_params=pltpu.CompilerParams(
            dimension_semantics=("parallel",)),
        cost_estimate=cost,
    )(xt, w1, b1, w2, b2, w3, b3)

    return out[0, :B].reshape(B, 1)


def init_params(key):
    """PyTorch nn.Linear-style init: U(-1/sqrt(fan_in), +1/sqrt(fan_in)),
    weights stored torch-style as [fan_out, fan_in]."""
    def linear(key, fan_in, fan_out):
        kw, kb = jax.random.split(key)
        bound = 1.0 / jnp.sqrt(jnp.float32(fan_in))
        w = jax.random.uniform(kw, (fan_out, fan_in), jnp.float32, -bound, bound)
        b = jax.random.uniform(kb, (fan_out,), jnp.float32, -bound, bound)
        return w, b

    k1, k2, k3 = jax.random.split(key, 3)
    w1, b1 = linear(k1, IN_F, HID_F)
    w2, b2 = linear(k2, HID_F, MID_F)
    w3, b3 = linear(k3, MID_F, OUT_F)
    return {"w1": w1, "b1": b1, "w2": w2, "b2": b2, "w3": w3, "b3": b3}


def reference_forward(x, p):
    h1 = jnp.maximum(x @ p["w1"].T + p["b1"], 0.0)
    h2 = jnp.maximum(h1 @ p["w2"].T + p["b2"], 0.0)
    return jnp.tanh(h2 @ p["w3"].T + p["b3"])


if __name__ == "__main__":
    key = jax.random.PRNGKey(0)
    kx, kp = jax.random.split(key)
    params = init_params(kp)

    # Small single-tile case.
    batch = 8
    x = jax.random.normal(kx, (batch, IN_F), jnp.float32)
    out = jax.block_until_ready(chess_eval_net1(x, params))
    ref = reference_forward(x, params)
    assert out.shape == (batch, 1), out.shape
    err = float(jnp.max(jnp.abs(out - ref)))
    # bf16 matmul operands (layers 1-2) vs f32 reference -> loosened tolerance.
    assert err < 2e-2, f"mismatch (small batch): max abs err {err}"

    # Multi-tile case: batch not a multiple of the tile size, exercising the
    # padded-to-128 lanes + ragged-grid path and the 2-step "parallel" grid.
    batch2 = 300
    x2 = jax.random.normal(jax.random.PRNGKey(1), (batch2, IN_F), jnp.float32)
    out2 = jax.block_until_ready(chess_eval_net1(x2, params, tile_b=256))
    ref2 = reference_forward(x2, params)
    assert out2.shape == (batch2, 1), out2.shape
    err2 = float(jnp.max(jnp.abs(out2 - ref2)))
    assert err2 < 2e-2, f"mismatch (multi-tile): max abs err {err2}"

    print("KERNEL_OK")
</pallas_src>

<mosaic_0001>
module attributes {stable_mosaic.version = 11 : i64} {
  func.func @mlp_kernel(%arg0: i32, %arg1: memref<71x128xbf16, #tpu.memory_space<vmem>>, %arg2: memref<71x71xbf16, #tpu.memory_space<vmem>>, %arg3: memref<71x1xf32, #tpu.memory_space<vmem>>, %arg4: memref<10x71xbf16, #tpu.memory_space<vmem>>, %arg5: memref<10x1xf32, #tpu.memory_space<vmem>>, %arg6: memref<10x1xf32, #tpu.memory_space<vmem>>, %arg7: memref<1x1xf32, #tpu.memory_space<vmem>>, %arg8: memref<1x128xf32, #tpu.memory_space<vmem>>) attributes {dimension_semantics = [#tpu.dimension_semantics<parallel>], iteration_bounds = array<i64: 1>, scalar_prefetch = 0 : i64, scratch_operands = 0 : i64, tpu.core_type = #tpu.core_type<tc>, window_params = [{transform_indices = @transform_0, window_bounds = array<i64: 71, 128>}, {pipeline_mode = #tpu.pipeline_mode<synchronous>, transform_indices = @transform_1, window_bounds = array<i64: 71, 71>}, {pipeline_mode = #tpu.pipeline_mode<synchronous>, transform_indices = @transform_2, window_bounds = array<i64: 71, 1>}, {pipeline_mode = #tpu.pipeline_mode<synchronous>, transform_indices = @transform_3, window_bounds = array<i64: 10, 71>}, {pipeline_mode = #tpu.pipeline_mode<synchronous>, transform_indices = @transform_4, window_bounds = array<i64: 10, 1>}, {pipeline_mode = #tpu.pipeline_mode<synchronous>, transform_indices = @transform_5, window_bounds = array<i64: 10, 1>}, {pipeline_mode = #tpu.pipeline_mode<synchronous>, transform_indices = @transform_6, window_bounds = array<i64: 1, 1>}, {transform_indices = @transform_7, window_bounds = array<i64: 1, 128>}]} {
    %c0 = arith.constant 0 : index
    %c0_0 = arith.constant 0 : index
    %0 = vector.load %arg2[%c0, %c0_0] : memref<71x71xbf16, #tpu.memory_space<vmem>>, vector<71x71xbf16>
    %c0_1 = arith.constant 0 : index
    %c0_2 = arith.constant 0 : index
    %1 = vector.load %arg1[%c0_1, %c0_2] : memref<71x128xbf16, #tpu.memory_space<vmem>>, vector<71x128xbf16>
    %cst = arith.constant dense<0.000000e+00> : vector<71x128xf32>
    %2 = tpu.matmul %0, %1, %cst {dimension_numbers = #tpu.dot_dimension_numbers<[1], [0], [0], [1], [0, 0, 1, 1], [], []>} : vector<71x71xbf16>, vector<71x128xbf16>, vector<71x128xf32> -> vector<71x128xf32>
    %c0_3 = arith.constant 0 : index
    %c0_4 = arith.constant 0 : index
    %3 = vector.load %arg3[%c0_3, %c0_4] : memref<71x1xf32, #tpu.memory_space<vmem>>, vector<71x1xf32>
    %4 = vector.broadcast %3 : vector<71x1xf32> to vector<71x128xf32>
    %5 = arith.addf %2, %4 : vector<71x128xf32>
    %cst_5 = arith.constant 0.000000e+00 : f32
    %6 = vector.broadcast %cst_5 : f32 to vector<71x128xf32>
    %7 = arith.maximumf %5, %6 : vector<71x128xf32>
    %c0_6 = arith.constant 0 : index
    %c0_7 = arith.constant 0 : index
    %8 = vector.load %arg4[%c0_6, %c0_7] : memref<10x71xbf16, #tpu.memory_space<vmem>>, vector<10x71xbf16>
    %9 = arith.truncf %7 : vector<71x128xf32> to vector<71x128xbf16>
    %cst_8 = arith.constant dense<0.000000e+00> : vector<10x128xf32>
    %10 = tpu.matmul %8, %9, %cst_8 {dimension_numbers = #tpu.dot_dimension_numbers<[1], [0], [0], [1], [0, 0, 1, 1], [], []>} : vector<10x71xbf16>, vector<71x128xbf16>, vector<10x128xf32> -> vector<10x128xf32>
    %c0_9 = arith.constant 0 : index
    %c0_10 = arith.constant 0 : index
    %11 = vector.load %arg5[%c0_9, %c0_10] : memref<10x1xf32, #tpu.memory_space<vmem>>, vector<10x1xf32>
    %12 = vector.broadcast %11 : vector<10x1xf32> to vector<10x128xf32>
    %13 = arith.addf %10, %12 : vector<10x128xf32>
    %cst_11 = arith.constant 0.000000e+00 : f32
    %14 = vector.broadcast %cst_11 : f32 to vector<10x128xf32>
    %15 = arith.maximumf %13, %14 : vector<10x128xf32>
    %c0_12 = arith.constant 0 : index
    %c0_13 = arith.constant 0 : index
    %16 = vector.load %arg6[%c0_12, %c0_13] : memref<10x1xf32, #tpu.memory_space<vmem>>, vector<10x1xf32>
    %17 = vector.broadcast %16 : vector<10x1xf32> to vector<10x128xf32>
    %18 = arith.mulf %15, %17 : vector<10x128xf32>
    %cst_14 = arith.constant dense<0.000000e+00> : vector<128xf32>
    %19 = vector.multi_reduction <add>, %18, %cst_14 [0] : vector<10x128xf32> to vector<128xf32>
    %20 = vector.shape_cast %19 : vector<128xf32> to vector<1x128xf32>
    %c0_15 = arith.constant 0 : index
    %c0_16 = arith.constant 0 : index
    %21 = vector.load %arg7[%c0_15, %c0_16] : memref<1x1xf32, #tpu.memory_space<vmem>>, vector<1x1xf32>
    %22 = vector.broadcast %21 : vector<1x1xf32> to vector<1x128xf32>
    %23 = arith.addf %20, %22 : vector<1x128xf32>
    %24 = math.tanh %23 : vector<1x128xf32>
    %c0_17 = arith.constant 0 : index
    %c0_18 = arith.constant 0 : index
    %25 = vector.load %arg8[%c0_17, %c0_18] : memref<1x128xf32, #tpu.memory_space<vmem>>, vector<1x128xf32>
    tpu.vector_store %arg8[%c0_17, %c0_18], %24 {strides = array<i32>} : memref<1x128xf32, #tpu.memory_space<vmem>>, vector<1x128xf32>,
    return
  }
  func.func @transform_0(%arg0: i32) -> (i32, i32) {
    %c0_i32 = arith.constant 0 : i32
    %c0_i32_0 = arith.constant 0 : i32
    return %c0_i32, %arg0 : i32, i32
  }
  func.func @transform_1(%arg0: i32) -> (i32, i32) {
    %c0_i32 = arith.constant 0 : i32
    %c0_i32_0 = arith.constant 0 : i32
    %c0_i32_1 = arith.constant 0 : i32
    return %c0_i32, %c0_i32_0 : i32, i32
  }
  func.func @transform_2(%arg0: i32) -> (i32, i32) {
    %c0_i32 = arith.constant 0 : i32
    %c0_i32_0 = arith.constant 0 : i32
    %c0_i32_1 = arith.constant 0 : i32
    return %c0_i32, %c0_i32_0 : i32, i32
  }
  func.func @transform_3(%arg0: i32) -> (i32, i32) {
    %c0_i32 = arith.constant 0 : i32
    %c0_i32_0 = arith.constant 0 : i32
    %c0_i32_1 = arith.constant 0 : i32
    return %c0_i32, %c0_i32_0 : i32, i32
  }
  func.func @transform_4(%arg0: i32) -> (i32, i32) {
    %c0_i32 = arith.constant 0 : i32
    %c0_i32_0 = arith.constant 0 : i32
    %c0_i32_1 = arith.constant 0 : i32
    return %c0_i32, %c0_i32_0 : i32, i32
  }
  func.func @transform_5(%arg0: i32) -> (i32, i32) {
    %c0_i32 = arith.constant 0 : i32
    %c0_i32_0 = arith.constant 0 : i32
    %c0_i32_1 = arith.constant 0 : i32
    return %c0_i32, %c0_i32_0 : i32, i32
  }
  func.func @transform_6(%arg0: i32) -> (i32, i32) {
    %c0_i32 = arith.constant 0 : i32
    %c0_i32_0 = arith.constant 0 : i32
    %c0_i32_1 = arith.constant 0 : i32
    return %c0_i32, %c0_i32_0 : i32, i32
  }
  func.func @transform_7(%arg0: i32) -> (i32, i32) {
    %c0_i32 = arith.constant 0 : i32
    %c0_i32_0 = arith.constant 0 : i32
    return %c0_i32, %arg0 : i32, i32
  }
}

</mosaic_0001>

<llo_original>
// kernel: tpu_custom_call.1
$region0: #{tpu_custom_call.1}
  #allocation0 [shape = 'u32[]', space=smem, size = 0x4, offset = 0x4, fixed_abs, tag = 'smem constant byte address 0x4 - core index']
  #allocation1 [shape = 'u32[144,128]{1,0:T(1,128)}', space=vmem, size = 0x12000, scoped, tag = 'internal scratch']
  #allocation2 [shape = 'f32[1,1]{1,0:T(1,128)S(1)}', space=vmem, size = 0x200, scoped, tag = 'scoped memory for tpu_custom_call.1']
  %s0 = inlined_call_operand.vmem [shape: bf16[71,128], index: 0, kind: input, shape index: {}]
  %s1 = inlined_call_operand.vmem [shape: bf16[71,71], index: 1, kind: input, shape index: {}]
  %s2 = inlined_call_operand.vmem [shape: f32[71,1], index: 2, kind: input, shape index: {}]
  %s3 = inlined_call_operand.vmem [shape: bf16[10,71], index: 3, kind: input, shape index: {}]
  %s4 = inlined_call_operand.vmem [shape: f32[10,1], index: 4, kind: input, shape index: {}]
  %s5 = inlined_call_operand.vmem [shape: f32[10,1], index: 5, kind: input, shape index: {}]
  %s6 = inlined_call_operand.<no memory space> [shape: f32[1,1], index: 6, kind: input, shape index: {}]
  %s7 = inlined_call_operand.hbm [shape: f32[1,128], index: 7, kind: output, shape index: {}]
  %s8 = sld [smem:[#allocation0]]
  $region38: #{tpu_custom_call.1} parent=0
    _
  %s10 = ssub.s32 1, %s8
  %s11 = scalar_select 0, %s10, %s8
  %v12 = vstv %s6
  %13 = vst [vmem:[#allocation2] sm:$0x1] %v12
  $region1: #{tpu_custom_call.1} parent=0
    #allocation3 [shape = 'u8[512]{0}', space=vmem, size = 0x400, scoped, tag = 'output window, operand 0, single buffered']
    #allocation4 [shape = 's32[1]{0}', space=sflag, size = 0x4, scoped, tag = 'scoped memory for tpu_custom_call.1']
    %14 = vsyncpa [#allocation4], 0
    // Predicated region
    $region2: #{tpu_custom_call.1} parent=1 // pred_check
      _
    $region3: #{tpu_custom_call.1} parent=1 // pred_check_branch
      %16 = sbr.rel (0) target = $region5
    $region4: #{tpu_custom_call.1} parent=1 // pred_region
      _
    $region5: #{tpu_custom_call.1} parent=1 // pred_fallthru
      _
    // Predicated region
    $region6: #{tpu_custom_call.1} parent=1 // pred_check
      _
    $region7: #{tpu_custom_call.1} parent=1 // pred_check_branch
      %18 = sbr.rel (0) target = $region9
    $region8: #{tpu_custom_call.1} parent=1 // pred_region
      _
    $region9: #{tpu_custom_call.1} parent=1 // pred_fallthru
      _
    // Predicated region
    $region10: #{tpu_custom_call.1} parent=1 // pred_check
      _
    $region11: #{tpu_custom_call.1} parent=1 // pred_check_branch
      %20 = sbr.rel (0) target = $region13
    $region12: #{tpu_custom_call.1} parent=1 // pred_region
      _
    $region13: #{tpu_custom_call.1} parent=1 // pred_fallthru
      _
    // Predicated region
    $region14: #{tpu_custom_call.1} parent=1 // pred_check
      _
    $region15: #{tpu_custom_call.1} parent=1 // pred_check_branch
      %22 = sbr.rel (0) target = $region17
    $region16: #{tpu_custom_call.1} parent=1 // pred_region
      _
    $region17: #{tpu_custom_call.1} parent=1 // pred_fallthru
      _
    // Predicated region
    $region18: #{tpu_custom_call.1} parent=1 // pred_check
      _
    $region19: #{tpu_custom_call.1} parent=1 // pred_check_branch
      %24 = sbr.rel (0) target = $region21
    $region20: #{tpu_custom_call.1} parent=1 // pred_region
      _
    $region21: #{tpu_custom_call.1} parent=1 // pred_fallthru
      _
    // Predicated region
    $region22: #{tpu_custom_call.1} parent=1 // pred_check
      _
    $region23: #{tpu_custom_call.1} parent=1 // pred_check_branch
      %26 = sbr.rel (0) target = $region25
    $region24: #{tpu_custom_call.1} parent=1 // pred_region
      _
    $region25: #{tpu_custom_call.1} parent=1 // pred_fallthru
      _
    // Predicated region
    $region26: #{tpu_custom_call.1} parent=1 // pred_check
      _
    $region27: #{tpu_custom_call.1} parent=1 // pred_check_branch
      %28 = sbr.rel (0) target = $region29
    $region28: #{tpu_custom_call.1} parent=1 // pred_region
      _
    $region29: #{tpu_custom_call.1} parent=1 // pred_fallthru
      _
    %v30 = vld [vmem:[%s1] sm:$0xf]
    %v31 = vld [vmem:[%s1 + $0x4] sm:$0xf]
    %v32 = vld [vmem:[%s1 + $0x8] sm:$0xf]
    %v33 = vld [vmem:[%s1 + $0xc] sm:$0xf]
    %v34 = vld [vmem:[%s1 + $0x10] sm:$0xf]
    %v35 = vld [vmem:[%s1 + $0x14] sm:$0xf]
    %v36 = vld [vmem:[%s1 + $0x18] sm:$0xf]
    %v37 = vld [vmem:[%s1 + $0x1c] sm:$0xf]
    %v38 = vld [vmem:[%s1 + $0x20] sm:$0xf]
    %v39 = vld [vmem:[%s0] sm:$0xf]
    %v40 = vld [vmem:[%s0 + $0x4] sm:$0xf]
    %v41 = vld [vmem:[%s0 + $0x8] sm:$0xf]
    %v42 = vld [vmem:[%s0 + $0xc] sm:$0xf]
    %v43 = vld [vmem:[%s0 + $0x10] sm:$0xf]
    %v44 = vld [vmem:[%s0 + $0x14] sm:$0xf]
    %v45 = vld [vmem:[%s0 + $0x18] sm:$0xf]
    %v46 = vld [vmem:[%s0 + $0x1c] sm:$0xf]
    %v47 = vld [vmem:[%s0 + $0x20] sm:$0xf]
    %v48 = vld [vmem:[%s2] sm:$0xff]
    %v49 = vld [vmem:[%s2 + $0x8] sm:$0xff]
    %v50 = vld [vmem:[%s2 + $0x10] sm:$0xff]
    %v51 = vld [vmem:[%s2 + $0x18] sm:$0xff]
    %v52 = vld [vmem:[%s2 + $0x20] sm:$0xff]
    %v53 = vld [vmem:[%s2 + $0x28] sm:$0xff]
    %v54 = vld [vmem:[%s2 + $0x30] sm:$0xff]
    %v55 = vld [vmem:[%s2 + $0x38] sm:$0xff]
    %v56 = vld [vmem:[%s2 + $0x40] sm:$0x7f]
    %58 = vset.pattern.permute.xlu0 0
    %59 = vperm.xlu0 %58, %v48
    %v60 = vpop.permute.xlu0 %59
    %63 = vset.pattern.permute.xlu0 0
    %64 = vperm.xlu0 %63, %v49
    %v65 = vpop.permute.xlu0 %64
    %68 = vset.pattern.permute.xlu0 0
    %69 = vperm.xlu0 %68, %v50
    %v70 = vpop.permute.xlu0 %69
    %73 = vset.pattern.permute.xlu0 0
    %74 = vperm.xlu0 %73, %v51
    %v75 = vpop.permute.xlu0 %74
    %78 = vset.pattern.permute.xlu0 0
    %79 = vperm.xlu0 %78, %v52
    %v80 = vpop.permute.xlu0 %79
    %83 = vset.pattern.permute.xlu0 0
    %84 = vperm.xlu0 %83, %v53
    %v85 = vpop.permute.xlu0 %84
    %88 = vset.pattern.permute.xlu0 0
    %89 = vperm.xlu0 %88, %v54
    %v90 = vpop.permute.xlu0 %89
    %93 = vset.pattern.permute.xlu0 0
    %94 = vperm.xlu0 %93, %v55
    %v95 = vpop.permute.xlu0 %94
    %98 = vset.pattern.permute.xlu0 0
    %99 = vperm.xlu0 %98, %v56
    %v100 = vpop.permute.xlu0 %99
    %v111 = vunpack.c.l.b16 %v30
    %v112 = vunpack.c.l.b16 %v31
    %v113 = vunpack.c.l.b16 %v32
    %v114 = vunpack.c.l.b16 %v33
    %v115 = vunpack.c.l.b16 %v34
    %v116 = vunpack.c.l.b16 %v35
    %v117 = vunpack.c.l.b16 %v36
    %v118 = vunpack.c.l.b16 %v37
    %v119 = vunpack.c.l.b16 %v38
    %v120 = vpack.c.b16 %v112, %v111
    %v121 = vpack.c.b16 %v114, %v113
    %v122 = vpack.c.b16 %v116, %v115
    %v123 = vpack.c.b16 %v118, %v117
    %v124 = vpack.c.b16 %v119, %v119
    %v134 = vunpack.c.l.b16 %v39
    %v135 = vunpack.c.l.b16 %v40
    %v136 = vunpack.c.l.b16 %v41
    %v137 = vunpack.c.l.b16 %v42
    %v138 = vunpack.c.l.b16 %v43
    %v139 = vunpack.c.l.b16 %v44
    %v140 = vunpack.c.l.b16 %v45
    %v141 = vunpack.c.l.b16 %v46
    %v142 = vunpack.c.l.b16 %v47
    %v143 = vpack.c.b16 %v135, %v134
    %v144 = vpack.c.b16 %v137, %v136
    %v145 = vpack.c.b16 %v139, %v138
    %v146 = vpack.c.b16 %v141, %v140
    %v147 = vpack.c.b16 %v142, %v142
    %vm152 = vcmask 580608
    %v154 = vsel %vm152, %v120, 0
    %v157 = vsel %vm152, %v121, 0
    %v160 = vsel %vm152, %v122, 0
    %v163 = vsel %vm152, %v123, 0
    %v166 = vsel %vm152, %v124, 0
    %vm168 = vcmask 1042432
    %vm169 = vcmask 1043456
    %v170 = vsel %vm168, 4294967295, 65535
    %v171 = vsel %vm169, %v170, 0
    %v173 = vand.u32 %v147, %v171
    %175 = vmatprep.subr.bf16.mxu0 0
    %176 = vmatpush1.bf16.msra.mxu0 %v143
    %177 = vmatprep.subr.bf16.mxu0 0
    %178 = vmatpush1.bf16.msra.mxu0 %v144
    %179 = vmatprep.subr.bf16.mxu0 0
    %180 = vmatpush1.bf16.msra.mxu0 %v145
    %181 = vmatprep.subr.bf16.mxu0 0
    %182 = vmatpush1.bf16.msra.mxu0 %v146
    %183 = vmatprep.subr.bf16.mxu0 0
    %184 = vmatpush1.bf16.msra.mxu0 %v173
    %185 = vmatprep.subr.bf16.mxu0 0
    %186 = vmatpush1.bf16.msra.mxu0 0
    %187 = vmatprep.subr.bf16.mxu0 0
    %188 = vmatpush1.bf16.msra.mxu0 0
    %189 = vmatprep.subr.bf16.mxu0 0
    %190 = vmatpush1.bf16.msra.mxu0 0
    %191 = vmatprep.subr.bf16.mxu0 0
    %192 = vmatpush1.bf16.msra.mxu0 0
    %193 = vmatprep.subr.bf16.mxu0 0
    %194 = vmatpush1.bf16.msra.mxu0 0
    %195 = vmatprep.subr.bf16.mxu0 0
    %196 = vmatpush1.bf16.msra.mxu0 0
    %197 = vmatprep.subr.bf16.mxu0 0
    %198 = vmatpush1.bf16.msra.mxu0 0
    %199 = vmatprep.subr.bf16.mxu0 0
    %200 = vmatpush1.bf16.msra.mxu0 0
    %201 = vmatprep.subr.bf16.mxu0 0
    %202 = vmatpush1.bf16.msra.mxu0 0
    %203 = vmatprep.subr.bf16.mxu0 0
    %204 = vmatpush1.bf16.msra.mxu0 0
    %205 = vmatprep.subr.bf16.mxu0 0
    %206 = vmatpush1.bf16.msra.mxu0 0
    %207 = vmatprep.mubr.bf16.mxu0 0
    %208 = vmatmul.mubr.bf16.gmra.mrb[0].mxu0 %v154
    %v209 = vpop.f32.mrb[0].mxu0
    %v210 = vadd.f32 %v60, %v209
    %v211 = vpop.f32.mrb[0].mxu0
    %v212 = vpop.f32.mrb[0].mxu0
    %v213 = vadd.f32 %v65, %v212
    %v214 = vpop.f32.mrb[0].mxu0
    %215 = vmatprep.mubr.bf16.mxu0 0
    %216 = vmatmul.mubr.bf16.gmra.mrb[0].mxu0 %v157
    %v217 = vpop.f32.mrb[0].mxu0
    %v218 = vadd.f32 %v70, %v217
    %v219 = vpop.f32.mrb[0].mxu0
    %v220 = vpop.f32.mrb[0].mxu0
    %v221 = vadd.f32 %v75, %v220
    %v222 = vpop.f32.mrb[0].mxu0
    %223 = vmatprep.mubr.bf16.mxu0 0
    %224 = vmatmul.mubr.bf16.gmra.mrb[0].mxu0 %v160
    %v225 = vpop.f32.mrb[0].mxu0
    %v226 = vadd.f32 %v80, %v225
    %v227 = vpop.f32.mrb[0].mxu0
    %v228 = vpop.f32.mrb[0].mxu0
    %v229 = vadd.f32 %v85, %v228
    %v230 = vpop.f32.mrb[0].mxu0
    %231 = vmatprep.mubr.bf16.mxu0 0
    %232 = vmatmul.mubr.bf16.gmra.mrb[0].mxu0 %v163
    %v233 = vpop.f32.mrb[0].mxu0
    %v234 = vadd.f32 %v90, %v233
    %v235 = vpop.f32.mrb[0].mxu0
    %v236 = vpop.f32.mrb[0].mxu0
    %v237 = vadd.f32 %v95, %v236
    %v238 = vpop.f32.mrb[0].mxu0
    %239 = vmatprep.mubr.bf16.mxu0 0
    %240 = vmatmul.mubr.bf16.gmra.mrb[0].mxu0 %v166
    %v241 = vpop.f32.mrb[0].mxu0
    %v242 = vadd.f32 %v100, %v241
    %v243 = vpop.f32.mrb[0].mxu0
    %v244 = vpop.f32.mrb[0].mxu0
    %v245 = vpop.f32.mrb[0].mxu0
    %246 = vdwg.mxu0
    %v247 = vmax.f32 %v210, 0.0
    %v248 = vmax.f32 %v213, 0.0
    %v249 = vmax.f32 %v218, 0.0
    %v250 = vmax.f32 %v221, 0.0
    %v251 = vmax.f32 %v226, 0.0
    %v252 = vmax.f32 %v229, 0.0
    %v253 = vmax.f32 %v234, 0.0
    %v254 = vmax.f32 %v237, 0.0
    %v255 = vmax.f32 %v242, 0.0
    %v256 = vld [vmem:[%s3] sm:$0xf]
    %v257 = vld [vmem:[%s3 + $0x4] sm:$0x1]
    %v258 = vpack.c.bf16 %v248, %v247
    %v259 = vpack.c.bf16 %v250, %v249
    %v260 = vpack.c.bf16 %v252, %v251
    %v261 = vpack.c.bf16 %v254, %v253
    %v262 = vpack.c.bf16 %v255, %v255
    %v263 = vld [vmem:[%s4] sm:$0xff]
    %v264 = vld [vmem:[%s4 + $0x8] sm:$0x3]
    %266 = vset.pattern.permute.xlu0 0
    %267 = vperm.xlu0 %266, %v263
    %v268 = vpop.permute.xlu0 %267
    %271 = vset.pattern.permute.xlu0 0
    %272 = vperm.xlu0 %271, %v264
    %v273 = vpop.permute.xlu0 %272
    %v277 = vunpack.c.l.b16 %v256
    %v278 = vunpack.c.l.b16 %v257
    %v279 = vpack.c.b16 %v278, %v277
    %v281 = vsel %vm152, %v279, 0
    %v284 = vand.u32 %v262, %v171
    %286 = vmatprep.subr.bf16.mxu0 0
    %287 = vmatpush1.bf16.msra.mxu0 %v258
    %288 = vmatprep.subr.bf16.mxu0 0
    %289 = vmatpush1.bf16.msra.mxu0 %v259
    %290 = vmatprep.subr.bf16.mxu0 0
    %291 = vmatpush1.bf16.msra.mxu0 %v260
    %292 = vmatprep.subr.bf16.mxu0 0
    %293 = vmatpush1.bf16.msra.mxu0 %v261
    %294 = vmatprep.subr.bf16.mxu0 0
    %295 = vmatpush1.bf16.msra.mxu0 %v284
    %296 = vmatprep.subr.bf16.mxu0 0
    %297 = vmatpush1.bf16.msra.mxu0 0
    %298 = vmatprep.subr.bf16.mxu0 0
    %299 = vmatpush1.bf16.msra.mxu0 0
    %300 = vmatprep.subr.bf16.mxu0 0
    %301 = vmatpush1.bf16.msra.mxu0 0
    %302 = vmatprep.subr.bf16.mxu0 0
    %303 = vmatpush1.bf16.msra.mxu0 0
    %304 = vmatprep.subr.bf16.mxu0 0
    %305 = vmatpush1.bf16.msra.mxu0 0
    %306 = vmatprep.subr.bf16.mxu0 0
    %307 = vmatpush1.bf16.msra.mxu0 0
    %308 = vmatprep.subr.bf16.mxu0 0
    %309 = vmatpush1.bf16.msra.mxu0 0
    %310 = vmatprep.subr.bf16.mxu0 0
    %311 = vmatpush1.bf16.msra.mxu0 0
    %312 = vmatprep.subr.bf16.mxu0 0
    %313 = vmatpush1.bf16.msra.mxu0 0
    %314 = vmatprep.subr.bf16.mxu0 0
    %315 = vmatpush1.bf16.msra.mxu0 0
    %316 = vmatprep.subr.bf16.mxu0 0
    %317 = vmatpush1.bf16.msra.mxu0 0
    %318 = vmatprep.mubr.bf16.mxu0 0
    %319 = vmatmul.mubr.bf16.gmra.mrb[0].mxu0 %v281
    %v320 = vpop.f32.mrb[0].mxu0
    %v321 = vadd.f32 %v268, %v320
    %v322 = vpop.f32.mrb[0].mxu0
    %v323 = vpop.f32.mrb[0].mxu0
    %v324 = vadd.f32 %v273, %v323
    %v325 = vpop.f32.mrb[0].mxu0
    %326 = vdwg.mxu0
    %v327 = vmax.f32 %v321, 0.0
    %v328 = vmax.f32 %v324, 0.0
    %v329 = vld [vmem:[%s5] sm:$0xff]
    %v330 = vld [vmem:[%s5 + $0x8] sm:$0x3]
    %332 = vset.pattern.permute.xlu0 0
    %333 = vperm.xlu0 %332, %v329
    %v334 = vpop.permute.xlu0 %333
    %337 = vset.pattern.permute.xlu0 0
    %338 = vperm.xlu0 %337, %v330
    %v339 = vpop.permute.xlu0 %338
    %v341 = vmul.f32 %v327, %v334
    %v342 = vmul.f32 %v328, %v339
    %vm343 = vcmask 1041408
    %v344 = vsel %vm343, %v342, 0.0
    %v345 = vadd.f32 %v341, %v344
    %v346 = vrot.slane %v345, 4
    %v347 = vadd.f32 %v345, %v346
    %v348 = vrot.slane %v347, 2
    %v349 = vadd.f32 %v347, %v348
    %v350 = vrot.slane %v349, 1
    %v351 = vadd.f32 %v349, %v350
    %v352 = vld [vmem:[#allocation2] sm:$0x1]
    %354 = vset.pattern.permute.xlu0 0
    %355 = vperm.xlu0 %354, %v352
    %v356 = vpop.permute.xlu0 %355
    %v358 = vlaneseq
    %v359 = vshrl.u32 %v358, 7
    %v360 = vsub.s32 0, %v359
    %v361 = vrot.slane %v356, %v360
    %v362 = vadd.f32 %v351, %v361
    %v363 = vtanh.pop %v362
    %364 = vst [vmem:[#allocation3] sm:$0x1] %v363
    // Predicated region
    $region30: #{tpu_custom_call.1} parent=1 // pred_check
      _
    $region31: #{tpu_custom_call.1} parent=1 // pred_check_branch
      %366 = sbr.rel (0) target = $region33
    $region32: #{tpu_custom_call.1} parent=1 // pred_region
      %s368 = ssub.s32 16, 16
      %369 = vsyncadd [#allocation4], %s368
      %s371 = sshll.u32 [#allocation3], 4
      %s372 = int_to_ptr.vmem [resolvable:$true] %s371
      %374 = dma.vmem_to_hbm [thread:$0]  %s372, 16, %s7, [#allocation4]
    $region33: #{tpu_custom_call.1} parent=1 // pred_fallthru
      _
    // Predicated region
    $region34: #{tpu_custom_call.1} parent=1 // pred_check
      _
    $region35: #{tpu_custom_call.1} parent=1 // pred_check_branch
      %376 = sbr.rel (0) target = $region37
    $region36: #{tpu_custom_call.1} parent=1 // pred_region
      %377 = dma.done [#allocation4], 16
    $region37: #{tpu_custom_call.1} parent=1 // pred_fallthru
      _
    %378 = vsyncpa [#allocation4], 1

</llo_original>
